<compile_context>
chip_gen: v7x
topology: tpu7x:2x2x1
jax: 0.10.0
libtpu: 0.0.40
codegen_flags: <defaults>
</compile_context>

<pallas_src>
import functools

import jax
import jax.numpy as jnp
from jax import lax
from jax.experimental import pallas as pl
from jax.experimental.pallas import tpu as pltpu


def _round_up(x, m):
    return ((x + m - 1) // m) * m


def _rbf_tile_kernel(neg_inv_bw_ref, xi_ref, xjt_ref, sqi_ref, sqj_ref,
                     out_ref, acc_ref, *, n_kernels, int_mul):
    """One (TM, TN) output tile; the feature (K) axis is the innermost grid dim.

    neg_inv_bw_ref : (n_kernels,) f32 in SMEM, holds -1 / (bandwidth * mult_k).
    xi_ref         : (TM, TK) bf16 row tile of X (i block, k slice).
    xjt_ref        : (TK, TN) bf16 tile of X^T (k slice, j block).
    sqi_ref        : (TM, 1)  f32 precomputed ||x_i||^2 for the i block.
    sqj_ref        : (1, TN)  f32 precomputed ||x_j||^2 for the j block.
    out_ref        : (TM, TN) f32 output tile (written at the last K step).
    acc_ref        : (TM, TN) f32 Gram accumulator (VMEM scratch).
    """
    k = pl.program_id(2)

    @pl.when(k == 0)
    def _():
        acc_ref[...] = jnp.zeros_like(acc_ref)

    # bf16 x bf16 -> f32 Gram tile on the MXU, canonical (M,K)x(K,N) form;
    # the RHS was transposed once in HBM so no per-tile XLU transpose.
    acc_ref[...] += lax.dot_general(
        xi_ref[...], xjt_ref[...],
        dimension_numbers=(((1,), (0,)), ((), ())),
        preferred_element_type=jnp.float32)

    @pl.when(k == pl.num_programs(2) - 1)
    def _():
        gram = acc_ref[...]
        # ||xi - xj||^2 = ||xi||^2 + ||xj||^2 - 2 <xi, xj>, clamped at 0.
        l2 = jnp.maximum(sqi_ref[...] + sqj_ref[...] - 2.0 * gram, 0.0)

        if int_mul is not None:
            # One EUP exp (widest bandwidth = largest multiplier), the rest by
            # VPU repeated powering:
            #   exp(-l2/(bw*m^i)) = exp(-l2/(bw*m^(i+1))) ** m
            base = jnp.exp(l2 * neg_inv_bw_ref[n_kernels - 1])
            total = base
            cur = base
            for _ in range(n_kernels - 1):
                nxt = cur
                for _ in range(int_mul - 1):
                    nxt = nxt * cur
                cur = nxt
                total = total + cur
        else:
            # General (non-integer mul_factor) path: one exp per bandwidth,
            # still divide-free (scalar-reciprocal multiply).
            total = jnp.zeros_like(l2)
            for kk in range(n_kernels):
                total = total + jnp.exp(l2 * neg_inv_bw_ref[kk])

        out_ref[...] = total.astype(out_ref.dtype)


def rbf_forward(x, n_kernels=5, mul_factor=2.0, bandwidth=None,
                tile=512, tk_max=1024):
    """Pallas-backed RBF.forward: returns the (N, N) summed Gaussian kernel."""
    assert x.ndim == 2
    n, d = x.shape
    x = jnp.asarray(x, jnp.float32)

    # Pairwise L2 is translation-invariant; centering avoids catastrophic
    # cancellation in the algebraic sum(L2) and in sqi + sqj - 2*gram.
    x = x - jnp.mean(x, axis=0, keepdims=True)

    # --- O(N*D) prologue: data-driven bandwidth without a Gram pass. ---
    if bandwidth is None:
        # TODO(synk): n == 1 divides by zero here, same as the PyTorch reference.
        sq_full = jnp.sum(x * x, axis=1)
        col_sum = jnp.sum(x, axis=0)
        sum_l2 = 2.0 * n * jnp.sum(sq_full) - 2.0 * jnp.sum(col_sum * col_sum)
        bw = sum_l2 / jnp.float32(n * n - n)
    else:
        bw = jnp.float32(bandwidth)

    exponents = (jnp.arange(n_kernels) - n_kernels // 2).astype(jnp.float32)
    multipliers = jnp.float32(mul_factor) ** exponents            # (n_kernels,)
    neg_inv_bw = (-1.0 / (bw * multipliers)).astype(jnp.float32)  # (n_kernels,)

    # --- bf16 MXU operands (f32 accumulation). Row norms come from the
    #     quantized data so the diagonal of sqi+sqj-2*gram cancels cleanly. ---
    x_bf = x.astype(jnp.bfloat16)
    sq = jnp.sum(jnp.square(x_bf.astype(jnp.float32)), axis=1)    # (N,)

    # --- Tiling. N is never rounded up to a tile multiple: boundary blocks
    #     are masked by Pallas and the output is written at (N, N) directly. ---
    if n <= tile:
        tm = tn = n
    else:
        assert tile % 128 == 0, "tile must be a multiple of 128 for multi-tile"
        tm = tn = tile
    d_pad = _round_up(d, 128)
    tk = min(d_pad, tk_max)
    d_pad = _round_up(d_pad, tk)     # contraction axis must be zero-padded
    nk = d_pad // tk

    x_pad = jnp.pad(x_bf, ((0, 0), (0, d_pad - d)))               # (N, Dp) bf16
    x_t = x_pad.T                                                 # (Dp, N) bf16, one-off
    sq_row = sq.reshape(n, 1)
    sq_col = sq.reshape(1, n)

    # Static fast path: integer mul_factor -> repeated powering in the kernel.
    mf = float(mul_factor)
    int_mul = int(round(mf)) if (abs(mf - round(mf)) < 1e-12
                                 and round(mf) >= 2) else None

    kernel = functools.partial(_rbf_tile_kernel,
                               n_kernels=int(n_kernels), int_mul=int_mul)
    grid = (pl.cdiv(n, tm), pl.cdiv(n, tn), nk)

    out = pl.pallas_call(
        kernel,
        out_shape=jax.ShapeDtypeStruct((n, n), jnp.float32),
        grid=grid,
        in_specs=[
            pl.BlockSpec(memory_space=pltpu.MemorySpace.SMEM),     # -1/bw_k
            pl.BlockSpec((tm, tk), lambda i, j, k: (i, k)),        # X rows i, K slice
            pl.BlockSpec((tk, tn), lambda i, j, k: (k, j)),        # X^T K slice, cols j
            pl.BlockSpec((tm, 1), lambda i, j, k: (i, 0)),         # ||x_i||^2
            pl.BlockSpec((1, tn), lambda i, j, k: (0, j)),         # ||x_j||^2
        ],
        out_specs=pl.BlockSpec((tm, tn), lambda i, j, k: (i, j)),
        scratch_shapes=[pltpu.VMEM((tm, tn), jnp.float32)],
        compiler_params=pltpu.CompilerParams(
            dimension_semantics=("parallel", "parallel", "arbitrary"),
            vmem_limit_bytes=48 * 1024 * 1024),
    )(neg_inv_bw, x_pad, x_t, sq_row, sq_col)

    return out


class RBF:
    """Thin functional stand-in for the PyTorch RBF module."""

    def __init__(self, n_kernels=5, mul_factor=2.0, bandwidth=None):
        self.n_kernels = n_kernels
        self.mul_factor = mul_factor
        self.bandwidth = bandwidth

    def __call__(self, x, tile=512):
        return rbf_forward(x, self.n_kernels, self.mul_factor,
                           self.bandwidth, tile=tile)


def _rbf_ref(x, n_kernels=5, mul_factor=2.0, bandwidth=None):
    """Pure-JAX f32 reference mirroring the PyTorch module (sanity check)."""
    x = x.astype(jnp.float32)
    n = x.shape[0]
    diff = x[:, None, :] - x[None, :, :]
    l2 = jnp.sum(diff * diff, axis=-1)
    if bandwidth is None:
        bw = jnp.sum(l2) / jnp.float32(n * n - n)
    else:
        bw = jnp.float32(bandwidth)
    mults = jnp.float32(mul_factor) ** (
        jnp.arange(n_kernels) - n_kernels // 2).astype(jnp.float32)
    return jnp.sum(jnp.exp(-l2[None, :, :] / (bw * mults)[:, None, None]), axis=0)


if __name__ == "__main__":
    key = jax.random.PRNGKey(0)
    k1, k2 = jax.random.split(key)

    # Tolerances account for bf16 MXU operands (f32 accumulation); a genuinely
    # wrong kernel produces errors orders of magnitude larger.
    RTOL, ATOL = 1e-2, 1e-4

    # Small single-tile case (N=16, D=32), data-driven bandwidth.
    N, D = 16, 32
    x = jax.random.normal(k1, (N, D), dtype=jnp.float32)
    rbf = RBF(n_kernels=5, mul_factor=2.0)
    out = jax.block_until_ready(rbf(x))
    ref = jax.block_until_ready(_rbf_ref(x))
    assert out.shape == (N, N), out.shape
    assert jnp.allclose(out, ref, rtol=RTOL, atol=ATOL), \
        float(jnp.max(jnp.abs(out - ref)))

    # Fixed-bandwidth variant on the same data.
    out_fix = jax.block_until_ready(RBF(5, 2.0, bandwidth=50.0)(x))
    ref_fix = jax.block_until_ready(_rbf_ref(x, bandwidth=50.0))
    assert jnp.allclose(out_fix, ref_fix, rtol=RTOL, atol=ATOL), \
        float(jnp.max(jnp.abs(out_fix - ref_fix)))

    # Non-integer mul_factor exercises the general (one-exp-per-bandwidth) path.
    out_g = jax.block_until_ready(RBF(5, 1.5)(x))
    ref_g = jax.block_until_ready(_rbf_ref(x, mul_factor=1.5))
    assert jnp.allclose(out_g, ref_g, rtol=RTOL, atol=ATOL), \
        float(jnp.max(jnp.abs(out_g - ref_g)))

    # Larger case (N=320, D=48): default tile -> single ragged block.
    N2, D2 = 320, 48
    x2 = jax.random.normal(k2, (N2, D2), dtype=jnp.float32)
    out2 = jax.block_until_ready(rbf(x2))
    ref2 = jax.block_until_ready(_rbf_ref(x2))
    assert out2.shape == (N2, N2), out2.shape
    assert jnp.allclose(out2, ref2, rtol=RTOL, atol=ATOL), \
        float(jnp.max(jnp.abs(out2 - ref2)))

    # Same data with tile=256: exercises the 2x2 grid with masked boundary
    # blocks (N is not rounded up to a tile multiple).
    out3 = jax.block_until_ready(rbf(x2, tile=256))
    assert jnp.allclose(out3, ref2, rtol=RTOL, atol=ATOL), \
        float(jnp.max(jnp.abs(out3 - ref2)))

    print("KERNEL_OK")
</pallas_src>

<mosaic_0001>
module attributes {stable_mosaic.version = 11 : i64} {
  func.func @_rbf_tile_kernel(%arg0: i32, %arg1: i32, %arg2: i32, %arg3: memref<5xf32, #tpu.memory_space<smem>>, %arg4: memref<16x128xbf16, #tpu.memory_space<vmem>>, %arg5: memref<128x16xbf16, #tpu.memory_space<vmem>>, %arg6: memref<16x1xf32, #tpu.memory_space<vmem>>, %arg7: memref<1x16xf32, #tpu.memory_space<vmem>>, %arg8: memref<16x16xf32, #tpu.memory_space<vmem>>, %arg9: memref<16x16xf32, #tpu.memory_space<vmem>>) attributes {dimension_semantics = [#tpu.dimension_semantics<parallel>, #tpu.dimension_semantics<parallel>, #tpu.dimension_semantics<arbitrary>], iteration_bounds = array<i64: 1, 1, 1>, scalar_prefetch = 0 : i64, scratch_operands = 1 : i64, tpu.core_type = #tpu.core_type<tc>, window_params = [{transform_indices = @transform_0, window_bounds = array<i64: 5>}, {transform_indices = @transform_1, window_bounds = array<i64: 16, 128>}, {transform_indices = @transform_2, window_bounds = array<i64: 128, 16>}, {transform_indices = @transform_3, window_bounds = array<i64: 16, 1>}, {transform_indices = @transform_4, window_bounds = array<i64: 1, 16>}, {transform_indices = @transform_5, window_bounds = array<i64: 16, 16>}]} {
    %c0_i32 = arith.constant 0 : i32
    %0 = arith.cmpi eq, %arg2, %c0_i32 : i32
    %1 = arith.extui %0 : i1 to i32
    %c0_i32_0 = arith.constant 0 : i32
    %2 = arith.cmpi ne, %1, %c0_i32_0 : i32
    scf.if %2 {
      %cst_10 = arith.constant 0.000000e+00 : f32
      %12 = vector.broadcast %cst_10 : f32 to vector<16x16xf32>
      %c0_11 = arith.constant 0 : index
      %c0_12 = arith.constant 0 : index
      %13 = vector.load %arg9[%c0_11, %c0_12] : memref<16x16xf32, #tpu.memory_space<vmem>>, vector<16x16xf32>
      tpu.vector_store %arg9[%c0_11, %c0_12], %12 {strides = array<i32>} : memref<16x16xf32, #tpu.memory_space<vmem>>, vector<16x16xf32>,
    } else {
    }
    %c0 = arith.constant 0 : index
    %c0_1 = arith.constant 0 : index
    %3 = vector.load %arg9[%c0, %c0_1] : memref<16x16xf32, #tpu.memory_space<vmem>>, vector<16x16xf32>
    %c0_2 = arith.constant 0 : index
    %c0_3 = arith.constant 0 : index
    %4 = vector.load %arg4[%c0_2, %c0_3] : memref<16x128xbf16, #tpu.memory_space<vmem>>, vector<16x128xbf16>
    %c0_4 = arith.constant 0 : index
    %c0_5 = arith.constant 0 : index
    %5 = vector.load %arg5[%c0_4, %c0_5] : memref<128x16xbf16, #tpu.memory_space<vmem>>, vector<128x16xbf16>
    %cst = arith.constant dense<0.000000e+00> : vector<16x16xf32>
    %6 = tpu.matmul %4, %5, %cst {dimension_numbers = #tpu.dot_dimension_numbers<[1], [0], [0], [1], [0, 0, 1, 1], [], []>} : vector<16x128xbf16>, vector<128x16xbf16>, vector<16x16xf32> -> vector<16x16xf32>
    %7 = arith.addf %3, %6 : vector<16x16xf32>
    %c0_6 = arith.constant 0 : index
    %c0_7 = arith.constant 0 : index
    %8 = vector.load %arg9[%c0_6, %c0_7] : memref<16x16xf32, #tpu.memory_space<vmem>>, vector<16x16xf32>
    tpu.vector_store %arg9[%c0_6, %c0_7], %7 {strides = array<i32>} : memref<16x16xf32, #tpu.memory_space<vmem>>, vector<16x16xf32>,
    %c0_i32_8 = arith.constant 0 : i32
    %9 = arith.cmpi eq, %arg2, %c0_i32_8 : i32
    %10 = arith.extui %9 : i1 to i32
    %c0_i32_9 = arith.constant 0 : i32
    %11 = arith.cmpi ne, %10, %c0_i32_9 : i32
    scf.if %11 {
      %c0_10 = arith.constant 0 : index
      %c0_11 = arith.constant 0 : index
      %12 = vector.load %arg9[%c0_10, %c0_11] : memref<16x16xf32, #tpu.memory_space<vmem>>, vector<16x16xf32>
      %c0_12 = arith.constant 0 : index
      %c0_13 = arith.constant 0 : index
      %13 = vector.load %arg6[%c0_12, %c0_13] : memref<16x1xf32, #tpu.memory_space<vmem>>, vector<16x1xf32>
      %c0_14 = arith.constant 0 : index
      %c0_15 = arith.constant 0 : index
      %14 = vector.load %arg7[%c0_14, %c0_15] : memref<1x16xf32, #tpu.memory_space<vmem>>, vector<1x16xf32>
      %15 = vector.broadcast %13 : vector<16x1xf32> to vector<16x16xf32>
      %16 = vector.broadcast %14 : vector<1x16xf32> to vector<16x16xf32>
      %17 = arith.addf %15, %16 : vector<16x16xf32>
      %cst_16 = arith.constant 2.000000e+00 : f32
      %18 = vector.broadcast %cst_16 : f32 to vector<16x16xf32>
      %19 = arith.mulf %18, %12 : vector<16x16xf32>
      %20 = arith.subf %17, %19 : vector<16x16xf32>
      %cst_17 = arith.constant 0.000000e+00 : f32
      %21 = vector.broadcast %cst_17 : f32 to vector<16x16xf32>
      %22 = arith.maximumf %20, %21 : vector<16x16xf32>
      %c4 = arith.constant 4 : index
      %23 = memref.load %arg3[%c4] : memref<5xf32, #tpu.memory_space<smem>>
      %24 = vector.broadcast %23 : f32 to vector<16x16xf32>
      %25 = arith.mulf %22, %24 : vector<16x16xf32>
      %26 = math.exp %25 : vector<16x16xf32>
      %27 = arith.mulf %26, %26 : vector<16x16xf32>
      %28 = arith.addf %26, %27 : vector<16x16xf32>
      %29 = arith.mulf %27, %27 : vector<16x16xf32>
      %30 = arith.addf %28, %29 : vector<16x16xf32>
      %31 = arith.mulf %29, %29 : vector<16x16xf32>
      %32 = arith.addf %30, %31 : vector<16x16xf32>
      %33 = arith.mulf %31, %31 : vector<16x16xf32>
      %34 = arith.addf %32, %33 : vector<16x16xf32>
      %c0_18 = arith.constant 0 : index
      %c0_19 = arith.constant 0 : index
      %35 = vector.load %arg8[%c0_18, %c0_19] : memref<16x16xf32, #tpu.memory_space<vmem>>, vector<16x16xf32>
      tpu.vector_store %arg8[%c0_18, %c0_19], %34 {strides = array<i32>} : memref<16x16xf32, #tpu.memory_space<vmem>>, vector<16x16xf32>,
    } else {
    }
    return
  }
  func.func @transform_0(%arg0: i32, %arg1: i32, %arg2: i32) -> i32 {
    %c0_i32 = arith.constant 0 : i32
    %c0_i32_0 = arith.constant 0 : i32
    return %c0_i32 : i32
  }
  func.func @transform_1(%arg0: i32, %arg1: i32, %arg2: i32) -> (i32, i32) {
    %c0_i32 = arith.constant 0 : i32
    return %arg0, %arg2 : i32, i32
  }
  func.func @transform_2(%arg0: i32, %arg1: i32, %arg2: i32) -> (i32, i32) {
    %c0_i32 = arith.constant 0 : i32
    return %arg2, %arg1 : i32, i32
  }
  func.func @transform_3(%arg0: i32, %arg1: i32, %arg2: i32) -> (i32, i32) {
    %c0_i32 = arith.constant 0 : i32
    %c0_i32_0 = arith.constant 0 : i32
    return %arg0, %c0_i32 : i32, i32
  }
  func.func @transform_4(%arg0: i32, %arg1: i32, %arg2: i32) -> (i32, i32) {
    %c0_i32 = arith.constant 0 : i32
    %c0_i32_0 = arith.constant 0 : i32
    return %c0_i32, %arg1 : i32, i32
  }
  func.func @transform_5(%arg0: i32, %arg1: i32, %arg2: i32) -> (i32, i32) {
    %c0_i32 = arith.constant 0 : i32
    return %arg0, %arg1 : i32, i32
  }
}

</mosaic_0001>

<llo_original>
// kernel: tpu_custom_call.1
$region0: #{tpu_custom_call.1}
  #allocation0 [shape = 'u32[]', space=smem, size = 0x4, offset = 0x4, fixed_abs, tag = 'smem constant byte address 0x4 - core index']
  #allocation1 [shape = 'u32[144,128]{1,0:T(1,128)}', space=vmem, size = 0x12000, scoped, tag = 'internal scratch']
  #allocation2 [shape = 'f32[16,16]{1,0:T(8,128)}', space=vmem, size = 0x2000, scoped, tag = 'scratch operand']
  %s0 = inlined_call_operand.vmem [shape: f32[5], index: 0, kind: input, shape index: {}]
  %s1 = inlined_call_operand.vmem [shape: bf16[16,128], index: 1, kind: input, shape index: {}]
  %s2 = inlined_call_operand.vmem [shape: bf16[128,16], index: 2, kind: input, shape index: {}]
  %s3 = inlined_call_operand.vmem [shape: f32[16,1], index: 3, kind: input, shape index: {}]
  %s4 = inlined_call_operand.vmem [shape: f32[1,16], index: 4, kind: input, shape index: {}]
  %s5 = inlined_call_operand.hbm [shape: f32[16,16], index: 5, kind: output, shape index: {}]
  %s6 = sld [smem:[#allocation0]]
  $region42: #{tpu_custom_call.1} parent=0
    _
  %s8 = ssub.s32 1, %s6
  %s9 = scalar_select 0, %s8, %s6
  $region1: #{tpu_custom_call.1} parent=0
    #allocation3 [shape = 'u8[512]{0}', space=smem, size = 0x200, scoped, tag = 'input window, operand 0, single buffered']
    #allocation4 [shape = 's32[1]{0}', space=sflag, size = 0x4, scoped, tag = 'scoped memory for tpu_custom_call.1']
    #allocation5 [shape = 's32[1]{0}', space=sflag, size = 0x4, scoped, tag = 'scoped memory for tpu_custom_call.1']
    #allocation6 [shape = 'u8[8192]{0}', space=vmem, size = 0x2000, scoped, tag = 'output window, operand 0, single buffered']
    %10 = vsyncpa [#allocation5], 0
    %11 = vsyncpa [#allocation4], 0
    // Predicated region
    $region2: #{tpu_custom_call.1} parent=1 // pred_check
      _
    $region3: #{tpu_custom_call.1} parent=1 // pred_check_branch
      %13 = sbr.rel (0) target = $region5
    $region4: #{tpu_custom_call.1} parent=1 // pred_region
      %s15 = ssub.s32 16, 16
      %16 = vsyncadd [#allocation5], %s15
      %s18 = sshll.u32 %s0, 4
      %s19 = int_to_ptr.vmem [resolvable:$true] %s18
      %21 = dma.vmem_to_smem %s19, 16, [#allocation3], [#allocation5]
    $region5: #{tpu_custom_call.1} parent=1 // pred_fallthru
      _
    // Predicated region
    $region6: #{tpu_custom_call.1} parent=1 // pred_check
      _
    $region7: #{tpu_custom_call.1} parent=1 // pred_check_branch
      %23 = sbr.rel (0) target = $region9
    $region8: #{tpu_custom_call.1} parent=1 // pred_region
      _
    $region9: #{tpu_custom_call.1} parent=1 // pred_fallthru
      _
    // Predicated region
    $region10: #{tpu_custom_call.1} parent=1 // pred_check
      _
    $region11: #{tpu_custom_call.1} parent=1 // pred_check_branch
      %25 = sbr.rel (0) target = $region13
    $region12: #{tpu_custom_call.1} parent=1 // pred_region
      _
    $region13: #{tpu_custom_call.1} parent=1 // pred_fallthru
      _
    // Predicated region
    $region14: #{tpu_custom_call.1} parent=1 // pred_check
      _
    $region15: #{tpu_custom_call.1} parent=1 // pred_check_branch
      %27 = sbr.rel (0) target = $region17
    $region16: #{tpu_custom_call.1} parent=1 // pred_region
      _
    $region17: #{tpu_custom_call.1} parent=1 // pred_fallthru
      _
    // Predicated region
    $region18: #{tpu_custom_call.1} parent=1 // pred_check
      _
    $region19: #{tpu_custom_call.1} parent=1 // pred_check_branch
      %29 = sbr.rel (0) target = $region21
    $region20: #{tpu_custom_call.1} parent=1 // pred_region
      _
    $region21: #{tpu_custom_call.1} parent=1 // pred_fallthru
      _
    // Predicated region
    $region22: #{tpu_custom_call.1} parent=1 // pred_check
      _
    $region23: #{tpu_custom_call.1} parent=1 // pred_check_branch
      %31 = sbr.rel (0) target = $region25
    $region24: #{tpu_custom_call.1} parent=1 // pred_region
      %32 = dma.done [#allocation5], 16
    $region25: #{tpu_custom_call.1} parent=1 // pred_fallthru
      _
    %33 = sfence
    %p35 = scmp.eq.s32.totalorder 0, 0
    // Predicated region
    $region26: #{tpu_custom_call.1} parent=1 // pred_check
      %p36 = pneg %p35
    $region27: #{tpu_custom_call.1} parent=1 // pred_check_branch
      %38 = sbr.rel (%p36) target = $region29
    $region28: #{tpu_custom_call.1} parent=1 // pred_region
      %vm39 = vcmask 130048
      %40 = vst.msk [vmem:[#allocation2] sm:$0xff] %vm39, 0.0
      %41 = vst.msk [vmem:[#allocation2 + $0x8] sm:$0xff] %vm39, 0.0
    $region29: #{tpu_custom_call.1} parent=1 // pred_fallthru
      _
    %v42 = vld [vmem:[#allocation2] sm:$0xff]
    %v43 = vld [vmem:[#allocation2 + $0x8] sm:$0xff]
    %v44 = vld [vmem:[%s1] sm:$0xf]
    %v45 = vld [vmem:[%s1 + $0x4] sm:$0xf]
    %v46 = vld [vmem:[%s2] sm:$0xf]
    %v47 = vld [vmem:[%s2 + $0x4] sm:$0xf]
    %v48 = vld [vmem:[%s2 + $0x8] sm:$0xf]
    %v49 = vld [vmem:[%s2 + $0xc] sm:$0xf]
    %v50 = vld [vmem:[%s2 + $0x10] sm:$0xf]
    %v51 = vld [vmem:[%s2 + $0x14] sm:$0xf]
    %v52 = vld [vmem:[%s2 + $0x18] sm:$0xf]
    %v53 = vld [vmem:[%s2 + $0x1c] sm:$0xf]
    %v54 = vld [vmem:[%s2 + $0x20] sm:$0xf]
    %v55 = vld [vmem:[%s2 + $0x24] sm:$0xf]
    %v56 = vld [vmem:[%s2 + $0x28] sm:$0xf]
    %v57 = vld [vmem:[%s2 + $0x2c] sm:$0xf]
    %v58 = vld [vmem:[%s2 + $0x30] sm:$0xf]
    %v59 = vld [vmem:[%s2 + $0x34] sm:$0xf]
    %v60 = vld [vmem:[%s2 + $0x38] sm:$0xf]
    %v61 = vld [vmem:[%s2 + $0x3c] sm:$0xf]
    %v64 = vunpack.c.l.b16 %v44
    %v65 = vunpack.c.l.b16 %v45
    %v66 = vpack.c.b16 %v65, %v64
    %v84 = vunpack.c.l.b16 %v46
    %v85 = vunpack.c.l.b16 %v47
    %v86 = vunpack.c.l.b16 %v48
    %v87 = vunpack.c.l.b16 %v49
    %v88 = vunpack.c.l.b16 %v50
    %v89 = vunpack.c.l.b16 %v51
    %v90 = vunpack.c.l.b16 %v52
    %v91 = vunpack.c.l.b16 %v53
    %v92 = vunpack.c.l.b16 %v54
    %v93 = vunpack.c.l.b16 %v55
    %v94 = vunpack.c.l.b16 %v56
    %v95 = vunpack.c.l.b16 %v57
    %v96 = vunpack.c.l.b16 %v58
    %v97 = vunpack.c.l.b16 %v59
    %v98 = vunpack.c.l.b16 %v60
    %v99 = vunpack.c.l.b16 %v61
    %v100 = vpack.c.b16 %v85, %v84
    %v101 = vpack.c.b16 %v87, %v86
    %v102 = vpack.c.b16 %v89, %v88
    %v103 = vpack.c.b16 %v91, %v90
    %v104 = vpack.c.b16 %v93, %v92
    %v105 = vpack.c.b16 %v95, %v94
    %v106 = vpack.c.b16 %v97, %v96
    %v107 = vpack.c.b16 %v99, %v98
    %116 = vmatprep.subr.bf16.mxu0 0
    %117 = vmatpush1.bf16.msra.mxu0 %v100
    %118 = vmatprep.subr.bf16.mxu0 0
    %119 = vmatpush1.bf16.msra.mxu0 %v101
    %120 = vmatprep.subr.bf16.mxu0 0
    %121 = vmatpush1.bf16.msra.mxu0 %v102
    %122 = vmatprep.subr.bf16.mxu0 0
    %123 = vmatpush1.bf16.msra.mxu0 %v103
    %124 = vmatprep.subr.bf16.mxu0 0
    %125 = vmatpush1.bf16.msra.mxu0 %v104
    %126 = vmatprep.subr.bf16.mxu0 0
    %127 = vmatpush1.bf16.msra.mxu0 %v105
    %128 = vmatprep.subr.bf16.mxu0 0
    %129 = vmatpush1.bf16.msra.mxu0 %v106
    %130 = vmatprep.subr.bf16.mxu0 0
    %131 = vmatpush1.bf16.msra.mxu0 %v107
    %132 = vmatprep.subr.bf16.mxu0 0
    %133 = vmatpush1.bf16.msra.mxu0 0
    %134 = vmatprep.subr.bf16.mxu0 0
    %135 = vmatpush1.bf16.msra.mxu0 0
    %136 = vmatprep.subr.bf16.mxu0 0
    %137 = vmatpush1.bf16.msra.mxu0 0
    %138 = vmatprep.subr.bf16.mxu0 0
    %139 = vmatpush1.bf16.msra.mxu0 0
    %140 = vmatprep.subr.bf16.mxu0 0
    %141 = vmatpush1.bf16.msra.mxu0 0
    %142 = vmatprep.subr.bf16.mxu0 0
    %143 = vmatpush1.bf16.msra.mxu0 0
    %144 = vmatprep.subr.bf16.mxu0 0
    %145 = vmatpush1.bf16.msra.mxu0 0
    %146 = vmatprep.subr.bf16.mxu0 0
    %147 = vmatpush1.bf16.msra.mxu0 0
    %148 = vmatprep.mubr.bf16.mxu0 0
    %149 = vmatmul.mubr.bf16.gmra.mrb[0].mxu0 %v66
    %v150 = vpop.f32.mrb[0].mxu0
    %v151 = vadd.f32 0.0, %v150
    %v152 = vpop.f32.mrb[0].mxu0
    %v153 = vpop.f32.mrb[0].mxu0
    %v154 = vadd.f32 0.0, %v153
    %v155 = vpop.f32.mrb[0].mxu0
    %156 = vdwg.mxu0
    %v157 = vadd.f32 %v42, %v151
    %v158 = vadd.f32 %v43, %v154
    %vm159 = vcmask 130048
    %160 = vst.msk [vmem:[#allocation2] sm:$0xff] %vm159, %v157
    %161 = vst.msk [vmem:[#allocation2 + $0x8] sm:$0xff] %vm159, %v158
    // Predicated region
    $region30: #{tpu_custom_call.1} parent=1 // pred_check
      %p162 = pneg %p35
    $region31: #{tpu_custom_call.1} parent=1 // pred_check_branch
      %164 = sbr.rel (%p162) target = $region33
    $region32: #{tpu_custom_call.1} parent=1 // pred_region
      %v165 = vld [vmem:[#allocation2] sm:$0xff]
      %v166 = vld [vmem:[#allocation2 + $0x8] sm:$0xff]
      %v167 = vld [vmem:[%s3] sm:$0xff]
      %v168 = vld [vmem:[%s3 + $0x8] sm:$0xff]
      %v169 = vld [vmem:[%s4] sm:$0x1]
      %171 = vset.pattern.permute.xlu0 0
      %172 = vperm.xlu0 %171, %v167
      %v173 = vpop.permute.xlu0 %172
      %176 = vset.pattern.permute.xlu0 0
      %177 = vperm.xlu0 %176, %v168
      %v178 = vpop.permute.xlu0 %177
      %v181 = vlaneseq
      %v182 = vshrl.u32 %v181, 7
      %v183 = vsub.s32 0, %v182
      %v184 = vrot.slane %v169, %v183
      %v186 = vadd.f32 %v173, %v184
      %v187 = vadd.f32 %v178, %v184
      %v188 = vmul.f32 %v165, 2.0
      %v189 = vmul.f32 %v166, 2.0
      %v190 = vsub.f32 %v186, %v188
      %v191 = vsub.f32 %v187, %v189
      %v192 = vmax.f32 %v190, 0.0
      %v193 = vmax.f32 %v191, 0.0
      %s194 = sld [smem:[#allocation3 + $0x4]]
      %v195 = vstv %s194
      %v196 = vmul.f32 %v192, %v195
      %v197 = vmul.f32 %v193, %v195
      %v198 = vmul.f32 %v196, 1.442695
      %v199 = vpow.pop %v198
      %v200 = vmul.f32 %v197, 1.442695
      %v201 = vpow.pop %v200
      %v202 = vmul.f32 %v199, %v199
      %v203 = vmul.f32 %v201, %v201
      %v204 = vadd.f32 %v199, %v202
      %v205 = vadd.f32 %v201, %v203
      %v206 = vmul.f32 %v202, %v202
      %v207 = vmul.f32 %v203, %v203
      %v208 = vadd.f32 %v204, %v206
      %v209 = vadd.f32 %v205, %v207
      %v210 = vmul.f32 %v206, %v206
      %v211 = vmul.f32 %v207, %v207
      %v212 = vadd.f32 %v208, %v210
      %v213 = vadd.f32 %v209, %v211
      %v214 = vmul.f32 %v210, %v210
      %v215 = vmul.f32 %v211, %v211
      %v216 = vadd.f32 %v212, %v214
      %v217 = vadd.f32 %v213, %v215
      %218 = vst.msk [vmem:[#allocation6] sm:$0xff] %vm159, %v216
      %219 = vst.msk [vmem:[#allocation6 + $0x8] sm:$0xff] %vm159, %v217
    $region33: #{tpu_custom_call.1} parent=1 // pred_fallthru
      _
    // Predicated region
    $region34: #{tpu_custom_call.1} parent=1 // pred_check
      _
    $region35: #{tpu_custom_call.1} parent=1 // pred_check_branch
      %221 = sbr.rel (0) target = $region37
    $region36: #{tpu_custom_call.1} parent=1 // pred_region
      %s223 = ssub.s32 256, 256
      %224 = vsyncadd [#allocation4], %s223
      %s225 = sshll.u32 [#allocation6], 4
      %s226 = int_to_ptr.vmem [resolvable:$true] %s225
      %231 = dma.vmem_to_hbm [thread:$0]  %s226, 256, %s5, [#allocation4], 128, 128, 8
    $region37: #{tpu_custom_call.1} parent=1 // pred_fallthru
      _
    // Predicated region
    $region38: #{tpu_custom_call.1} parent=1 // pred_check
      _
    $region39: #{tpu_custom_call.1} parent=1 // pred_check_branch
      %233 = sbr.rel (0) target = $region41
    $region40: #{tpu_custom_call.1} parent=1 // pred_region
      %234 = dma.done [#allocation4], 256
    $region41: #{tpu_custom_call.1} parent=1 // pred_fallthru
      _
    %235 = vsyncpa [#allocation4], 1
    %236 = vsyncpa [#allocation5], 1

</llo_original>
